<compile_context>
chip_gen: v5e
topology: v5e:2x2
jax: 0.10.0
libtpu: 0.0.40
codegen_flags: <defaults>
</compile_context>

<pallas_src>
import functools
import math

import numpy as np

import jax
import jax.numpy as jnp
from jax.experimental import pallas as pl
from jax.experimental.pallas import tpu as pltpu


def _cdiv(a, b):
    return -(-a // b)


# ---------------------------------------------------------------------------
# Kernel bodies
# ---------------------------------------------------------------------------
def _sep_body(u_ref, v_ref, x_ref, o_ref, *, K, s, R, Bblk, Hout, Wout, TH):
    # u_ref, v_ref : (R*K,) f32 in SMEM; kernel2d ~= sum_r u_r v_r^T
    # x_ref        : (1, s, s, Hph, Wph*Bblk) polyphase planes in VMEM
    # o_ref        : (1, Hout, Wout*Bblk) in VMEM
    WoutB = Wout * Bblk
    for i0 in range(0, Hout, TH):
        th = min(TH, Hout - i0)
        # -- pass 1: vertical (strided rows), keeps all Wph columns ----------
        # t[q][r] : (th, Wph*Bblk) f32; only row (sublane) offsets, no shifts.
        t = []
        for q in range(s):
            t_q = [None] * R
            for di in range(K):
                p, oi = di % s, di // s
                win = x_ref[0, p, q, i0 + oi:i0 + oi + th, :].astype(jnp.float32)
                for r in range(R):
                    term = win * u_ref[r * K + di]
                    t_q[r] = term if t_q[r] is None else t_q[r] + term
            t.append(t_q)
        # -- pass 2: horizontal (strided cols via static lane offsets) -------
        acc = None
        for r in range(R):
            for dj in range(K):
                q, oj = dj % s, dj // s
                sl = jax.lax.slice(t[q][r], (0, oj * Bblk),
                                   (th, oj * Bblk + WoutB))
                term = sl * v_ref[r * K + dj]
                acc = term if acc is None else acc + term
        # bias is identically zero in the reference module.
        o_ref[0, i0:i0 + th, :] = acc.astype(o_ref.dtype)


def _dense_body(w_ref, x_ref, o_ref, *, K, s, Bblk, Hout, Wout, TH):
    # w_ref : (K*K,) f32 in SMEM (row-major taps)
    WoutB = Wout * Bblk
    oi_max = (K - 1) // s
    for i0 in range(0, Hout, TH):
        th = min(TH, Hout - i0)
        acc = None
        for dj in range(K):
            q, oj = dj % s, dj // s
            # Hoist the lane-offset window once per (dj, row-phase p); the
            # inner di loop then uses only cheap sublane (row) offsets.
            shifted = [
                x_ref[0, p, q, i0:i0 + th + oi_max,
                      oj * Bblk:(oj + Wout) * Bblk].astype(jnp.float32)
                for p in range(s)
            ]
            for di in range(K):
                p, oi = di % s, di // s
                sl = jax.lax.slice(shifted[p], (oi, 0), (oi + th, WoutB))
                term = sl * w_ref[di * K + dj]
                acc = term if acc is None else acc + term
        o_ref[0, i0:i0 + th, :] = acc.astype(o_ref.dtype)


# ---------------------------------------------------------------------------
# Block sizing helpers
# ---------------------------------------------------------------------------
def _vmem_capacity_bytes():
    try:
        return int(pltpu.get_tpu_info().vmem_capacity_bytes)
    except Exception:
        return 64 << 20  # conservative (v7x per-core) fallback


def _choose_bblk(B, Wout, per_plane_bytes, vmem_budget):
    """Planes packed onto the lane axis per grid step (lane density first)."""
    fit_cap = max(1, int(vmem_budget // max(per_plane_bytes, 1)))
    best, best_key = 1, None
    for bblk in range(1, min(fit_cap, 4096) + 1):
        lanes = Wout * bblk
        if lanes > 4096:          # no point going wider than ~32 vregs per row
            break
        padded = _cdiv(B, bblk) * bblk
        if padded - B > B:        # never pad the plane axis by more than 2x
            continue
        key = (lanes >= 128,      # unmasked, lane-dense stores
               lanes % 128 == 0,  # aligned lane tiles
               -abs(lanes - 512),  # a few vregs wide; amortizes per-step cost
               -(padded - B))     # minimal padding waste
        if best_key is None or key > best_key:
            best, best_key = bblk, key
    return best


# ---------------------------------------------------------------------------
# Forward wrapper
# ---------------------------------------------------------------------------
def down_kernel_forward(x, kernel2d, factor):
    """x: (N, C, H, W); kernel2d: (K, K) shared blur; stride = factor."""
    N, C, H, W = x.shape
    K = int(kernel2d.shape[0])
    pad = (K - 1) // 2
    s = int(factor)
    B = N * C
    Hout = (H + 2 * pad - K) // s + 1
    Wout = (W + 2 * pad - K) // s + 1
    Hp, Wp = H + 2 * pad, W + 2 * pad
    # Pad up to stride multiples so the polyphase split is a pure reshape.
    Hp2, Wp2 = _cdiv(Hp, s) * s, _cdiv(Wp, s) * s
    Hph, Wph = Hp2 // s, Wp2 // s
    itemsize = jnp.dtype(x.dtype).itemsize

    # --- factor the blur kernel (fixed module buffer => concrete array) ----
    w_np = np.asarray(jax.device_get(kernel2d), dtype=np.float64)
    Um, Sv, Vt = np.linalg.svd(w_np)
    sig = Sv / Sv[0] if Sv[0] > 0 else Sv
    R = max(1, int(np.sum(sig > 1e-6)))     # drop components at f32-noise level
    use_separable = R * (s + 1) <= K        # MAC count: R*(s+1)*K vs K*K

    # --- block sizing: lane density first, per-generation VMEM budget ------
    vmem_cap = _vmem_capacity_bytes()
    vmem_budget = int(0.35 * vmem_cap)      # headroom for scratch / pipelining
    per_plane_bytes = itemsize * (2 * Hp2 * Wp2 + 2 * Hout * Wout)
    Bblk = _choose_bblk(B, Wout, per_plane_bytes, vmem_budget)
    nblk = _cdiv(B, Bblk)
    B_pad = nblk * Bblk
    WoutB, WphB = Wout * Bblk, Wph * Bblk

    # --- row-chunk size: keep acc + pass-1 intermediates ~vreg resident ----
    if use_separable:
        per_row = WoutB + (R * s + 1) * WphB
    else:
        per_row = (s + 2) * WoutB
    TH = min(Hout, max(8, ((28 * 1024) // max(per_row, 1)) // 8 * 8))
    TH = max(1, TH)

    # --- single wrapper pass: zero-pad + polyphase split + lane interleave -
    xp = jnp.pad(x.reshape(B, H, W),
                 ((0, B_pad - B), (pad, pad + Hp2 - Hp), (pad, pad + Wp2 - Wp)))
    xph = xp.reshape(nblk, Bblk, Hph, s, Wph, s)   # (g, b, a, p, c, q)
    xph = xph.transpose(0, 3, 5, 2, 4, 1)          # (g, p, q, a, c, b)
    xph = xph.reshape(nblk, s, s, Hph, WphB)

    x_spec = pl.BlockSpec((1, s, s, Hph, WphB), lambda g: (g, 0, 0, 0, 0))
    o_spec = pl.BlockSpec((1, Hout, WoutB), lambda g: (g, 0, 0))
    smem_spec = pl.BlockSpec(memory_space=pltpu.MemorySpace.SMEM)

    if use_separable:
        u = (Um[:, :R] * np.sqrt(Sv[:R])).astype(np.float32)    # (K, R)
        v = (Vt[:R, :].T * np.sqrt(Sv[:R])).astype(np.float32)  # (K, R)
        weights = (jnp.asarray(u.T.reshape(-1)), jnp.asarray(v.T.reshape(-1)))
        body = functools.partial(_sep_body, K=K, s=s, R=R, Bblk=Bblk,
                                 Hout=Hout, Wout=Wout, TH=TH)
        in_specs = [smem_spec, smem_spec, x_spec]
        macs = int(B_pad) * R * K * Hout * (s * Wph + Wout)
    else:
        weights = (jnp.asarray(w_np.reshape(-1), dtype=jnp.float32),)
        body = functools.partial(_dense_body, K=K, s=s, Bblk=Bblk,
                                 Hout=Hout, Wout=Wout, TH=TH)
        in_specs = [smem_spec, x_spec]
        macs = int(B_pad) * K * K * Hout * Wout

    cost = pl.CostEstimate(
        flops=int(2 * macs),
        transcendentals=0,
        # Include the wrapper pad/transpose pass and output un-interleave.
        bytes_accessed=int(itemsize * (x.size + 2 * xph.size
                                       + 3 * nblk * Hout * WoutB)),
    )

    out = pl.pallas_call(
        body,
        out_shape=jax.ShapeDtypeStruct((nblk, Hout, WoutB), x.dtype),
        grid_spec=pltpu.PrefetchScalarGridSpec(
            num_scalar_prefetch=0,
            grid=(nblk,),
            in_specs=in_specs,
            out_specs=o_spec,
        ),
        compiler_params=pltpu.CompilerParams(
            dimension_semantics=("parallel",),
            vmem_limit_bytes=int(max(32 << 20, vmem_cap // 2)),
        ),
        cost_estimate=cost,
    )(*weights, xph)

    # Undo the lane interleave: (g, i, j*Bblk + b) -> (N, C, Hout, Wout).
    out = out.reshape(nblk, Hout, Wout, Bblk).transpose(0, 3, 1, 2)
    return out.reshape(B_pad, Hout, Wout)[:B].reshape(N, C, Hout, Wout)


def _reference_forward(x, kernel2d, factor):
    """Pure-JAX reference: exactly the PyTorch Conv2d construction."""
    N, C, H, W = x.shape
    K = kernel2d.shape[0]
    pad = (K - 1) // 2
    w_full = jnp.zeros((C, C, K, K), x.dtype)
    w_full = w_full.at[jnp.arange(C), jnp.arange(C)].set(kernel2d)
    return jax.lax.conv_general_dilated(
        x, w_full, window_strides=(factor, factor),
        padding=[(pad, pad), (pad, pad)],
        dimension_numbers=("NCHW", "OIHW", "NCHW"))


if __name__ == "__main__":
    # Module-equivalent config: 7x7 kernel, factor=2, channels=4.
    N, C, H, W = 2, 4, 16, 16
    K, factor = 7, 2

    # Deterministic 7x7 normalized Gaussian standing in for the f_set.mat blur.
    coords = jnp.arange(K, dtype=jnp.float32) - (K - 1) / 2.0
    g = jnp.exp(-(coords ** 2) / (2.0 * 1.5 ** 2))
    kernel2d = jnp.outer(g, g)
    kernel2d = (kernel2d / kernel2d.sum()).astype(jnp.float32)

    key = jax.random.PRNGKey(0)
    kx, kw = jax.random.split(key)
    x = jax.random.normal(kx, (N, C, H, W), dtype=jnp.float32)

    # Separable (rank-1 Gaussian) fast path.
    y = jax.block_until_ready(down_kernel_forward(x, kernel2d, factor))
    y_ref = jax.block_until_ready(_reference_forward(x, kernel2d, factor))
    assert y.shape == y_ref.shape, (y.shape, y_ref.shape)
    assert jnp.allclose(y, y_ref, atol=1e-4, rtol=1e-4), "separable path mismatch"

    # Dense fallback path (non-separable kernel, e.g. a rotated anisotropic blur).
    kernel_dense = 0.1 * jax.random.normal(kw, (K, K), dtype=jnp.float32)
    y2 = jax.block_until_ready(down_kernel_forward(x, kernel_dense, factor))
    y2_ref = jax.block_until_ready(_reference_forward(x, kernel_dense, factor))
    assert y2.shape == y2_ref.shape, (y2.shape, y2_ref.shape)
    assert jnp.allclose(y2, y2_ref, atol=1e-4, rtol=1e-4), "dense path mismatch"

    print("KERNEL_OK")
</pallas_src>

<mosaic_0001>
module attributes {stable_mosaic.version = 11 : i64} {
  func.func @_sep_body(%arg0: i32, %arg1: memref<7xf32, #tpu.memory_space<smem>>, %arg2: memref<7xf32, #tpu.memory_space<smem>>, %arg3: memref<1x2x2x11x176xf32, #tpu.memory_space<vmem>>, %arg4: memref<1x8x128xf32, #tpu.memory_space<vmem>>) attributes {dimension_semantics = [#tpu.dimension_semantics<parallel>], iteration_bounds = array<i64: 1>, scalar_prefetch = 0 : i64, scratch_operands = 0 : i64, tpu.core_type = #tpu.core_type<tc>, window_params = [{transform_indices = @transform_0, window_bounds = array<i64: 7>}, {transform_indices = @transform_1, window_bounds = array<i64: 7>}, {transform_indices = @transform_2, window_bounds = array<i64: 1, 2, 2, 11, 176>}, {transform_indices = @transform_3, window_bounds = array<i64: 1, 8, 128>}]} {
    %c0 = arith.constant 0 : index
    %c0_0 = arith.constant 0 : index
    %c0_1 = arith.constant 0 : index
    %c0_2 = arith.constant 0 : index
    %c0_3 = arith.constant 0 : index
    %0 = vector.load %arg3[%c0, %c0_0, %c0_1, %c0_2, %c0_3] : memref<1x2x2x11x176xf32, #tpu.memory_space<vmem>>, vector<1x1x1x8x176xf32>
    %1 = vector.shape_cast %0 : vector<1x1x1x8x176xf32> to vector<8x176xf32>
    %c0_4 = arith.constant 0 : index
    %2 = memref.load %arg1[%c0_4] : memref<7xf32, #tpu.memory_space<smem>>
    %3 = vector.broadcast %2 : f32 to vector<8x176xf32>
    %4 = arith.mulf %1, %3 : vector<8x176xf32>
    %c0_5 = arith.constant 0 : index
    %c1 = arith.constant 1 : index
    %c0_6 = arith.constant 0 : index
    %c0_7 = arith.constant 0 : index
    %c0_8 = arith.constant 0 : index
    %5 = vector.load %arg3[%c0_5, %c1, %c0_6, %c0_7, %c0_8] : memref<1x2x2x11x176xf32, #tpu.memory_space<vmem>>, vector<1x1x1x8x176xf32>
    %6 = vector.shape_cast %5 : vector<1x1x1x8x176xf32> to vector<8x176xf32>
    %c1_9 = arith.constant 1 : index
    %7 = memref.load %arg1[%c1_9] : memref<7xf32, #tpu.memory_space<smem>>
    %8 = vector.broadcast %7 : f32 to vector<8x176xf32>
    %9 = arith.mulf %6, %8 : vector<8x176xf32>
    %10 = arith.addf %4, %9 : vector<8x176xf32>
    %c0_10 = arith.constant 0 : index
    %c0_11 = arith.constant 0 : index
    %c0_12 = arith.constant 0 : index
    %c1_13 = arith.constant 1 : index
    %c0_14 = arith.constant 0 : index
    %11 = vector.load %arg3[%c0_10, %c0_11, %c0_12, %c1_13, %c0_14] : memref<1x2x2x11x176xf32, #tpu.memory_space<vmem>>, vector<1x1x1x8x176xf32>
    %12 = vector.shape_cast %11 : vector<1x1x1x8x176xf32> to vector<8x176xf32>
    %c2 = arith.constant 2 : index
    %13 = memref.load %arg1[%c2] : memref<7xf32, #tpu.memory_space<smem>>
    %14 = vector.broadcast %13 : f32 to vector<8x176xf32>
    %15 = arith.mulf %12, %14 : vector<8x176xf32>
    %16 = arith.addf %10, %15 : vector<8x176xf32>
    %c0_15 = arith.constant 0 : index
    %c1_16 = arith.constant 1 : index
    %c0_17 = arith.constant 0 : index
    %c1_18 = arith.constant 1 : index
    %c0_19 = arith.constant 0 : index
    %17 = vector.load %arg3[%c0_15, %c1_16, %c0_17, %c1_18, %c0_19] : memref<1x2x2x11x176xf32, #tpu.memory_space<vmem>>, vector<1x1x1x8x176xf32>
    %18 = vector.shape_cast %17 : vector<1x1x1x8x176xf32> to vector<8x176xf32>
    %c3 = arith.constant 3 : index
    %19 = memref.load %arg1[%c3] : memref<7xf32, #tpu.memory_space<smem>>
    %20 = vector.broadcast %19 : f32 to vector<8x176xf32>
    %21 = arith.mulf %18, %20 : vector<8x176xf32>
    %22 = arith.addf %16, %21 : vector<8x176xf32>
    %c0_20 = arith.constant 0 : index
    %c0_21 = arith.constant 0 : index
    %c0_22 = arith.constant 0 : index
    %c2_23 = arith.constant 2 : index
    %c0_24 = arith.constant 0 : index
    %23 = vector.load %arg3[%c0_20, %c0_21, %c0_22, %c2_23, %c0_24] : memref<1x2x2x11x176xf32, #tpu.memory_space<vmem>>, vector<1x1x1x8x176xf32>
    %24 = vector.shape_cast %23 : vector<1x1x1x8x176xf32> to vector<8x176xf32>
    %c4 = arith.constant 4 : index
    %25 = memref.load %arg1[%c4] : memref<7xf32, #tpu.memory_space<smem>>
    %26 = vector.broadcast %25 : f32 to vector<8x176xf32>
    %27 = arith.mulf %24, %26 : vector<8x176xf32>
    %28 = arith.addf %22, %27 : vector<8x176xf32>
    %c0_25 = arith.constant 0 : index
    %c1_26 = arith.constant 1 : index
    %c0_27 = arith.constant 0 : index
    %c2_28 = arith.constant 2 : index
    %c0_29 = arith.constant 0 : index
    %29 = vector.load %arg3[%c0_25, %c1_26, %c0_27, %c2_28, %c0_29] : memref<1x2x2x11x176xf32, #tpu.memory_space<vmem>>, vector<1x1x1x8x176xf32>
    %30 = vector.shape_cast %29 : vector<1x1x1x8x176xf32> to vector<8x176xf32>
    %c5 = arith.constant 5 : index
    %31 = memref.load %arg1[%c5] : memref<7xf32, #tpu.memory_space<smem>>
    %32 = vector.broadcast %31 : f32 to vector<8x176xf32>
    %33 = arith.mulf %30, %32 : vector<8x176xf32>
    %34 = arith.addf %28, %33 : vector<8x176xf32>
    %c0_30 = arith.constant 0 : index
    %c0_31 = arith.constant 0 : index
    %c0_32 = arith.constant 0 : index
    %c3_33 = arith.constant 3 : index
    %c0_34 = arith.constant 0 : index
    %35 = vector.load %arg3[%c0_30, %c0_31, %c0_32, %c3_33, %c0_34] : memref<1x2x2x11x176xf32, #tpu.memory_space<vmem>>, vector<1x1x1x8x176xf32>
    %36 = vector.shape_cast %35 : vector<1x1x1x8x176xf32> to vector<8x176xf32>
    %c6 = arith.constant 6 : index
    %37 = memref.load %arg1[%c6] : memref<7xf32, #tpu.memory_space<smem>>
    %38 = vector.broadcast %37 : f32 to vector<8x176xf32>
    %39 = arith.mulf %36, %38 : vector<8x176xf32>
    %40 = arith.addf %34, %39 : vector<8x176xf32>
    %c0_35 = arith.constant 0 : index
    %c0_36 = arith.constant 0 : index
    %c1_37 = arith.constant 1 : index
    %c0_38 = arith.constant 0 : index
    %c0_39 = arith.constant 0 : index
    %41 = vector.load %arg3[%c0_35, %c0_36, %c1_37, %c0_38, %c0_39] : memref<1x2x2x11x176xf32, #tpu.memory_space<vmem>>, vector<1x1x1x8x176xf32>
    %42 = vector.shape_cast %41 : vector<1x1x1x8x176xf32> to vector<8x176xf32>
    %c0_40 = arith.constant 0 : index
    %43 = memref.load %arg1[%c0_40] : memref<7xf32, #tpu.memory_space<smem>>
    %44 = vector.broadcast %43 : f32 to vector<8x176xf32>
    %45 = arith.mulf %42, %44 : vector<8x176xf32>
    %c0_41 = arith.constant 0 : index
    %c1_42 = arith.constant 1 : index
    %c1_43 = arith.constant 1 : index
    %c0_44 = arith.constant 0 : index
    %c0_45 = arith.constant 0 : index
    %46 = vector.load %arg3[%c0_41, %c1_42, %c1_43, %c0_44, %c0_45] : memref<1x2x2x11x176xf32, #tpu.memory_space<vmem>>, vector<1x1x1x8x176xf32>
    %47 = vector.shape_cast %46 : vector<1x1x1x8x176xf32> to vector<8x176xf32>
    %c1_46 = arith.constant 1 : index
    %48 = memref.load %arg1[%c1_46] : memref<7xf32, #tpu.memory_space<smem>>
    %49 = vector.broadcast %48 : f32 to vector<8x176xf32>
    %50 = arith.mulf %47, %49 : vector<8x176xf32>
    %51 = arith.addf %45, %50 : vector<8x176xf32>
    %c0_47 = arith.constant 0 : index
    %c0_48 = arith.constant 0 : index
    %c1_49 = arith.constant 1 : index
    %c1_50 = arith.constant 1 : index
    %c0_51 = arith.constant 0 : index
    %52 = vector.load %arg3[%c0_47, %c0_48, %c1_49, %c1_50, %c0_51] : memref<1x2x2x11x176xf32, #tpu.memory_space<vmem>>, vector<1x1x1x8x176xf32>
    %53 = vector.shape_cast %52 : vector<1x1x1x8x176xf32> to vector<8x176xf32>
    %c2_52 = arith.constant 2 : index
    %54 = memref.load %arg1[%c2_52] : memref<7xf32, #tpu.memory_space<smem>>
    %55 = vector.broadcast %54 : f32 to vector<8x176xf32>
    %56 = arith.mulf %53, %55 : vector<8x176xf32>
    %57 = arith.addf %51, %56 : vector<8x176xf32>
    %c0_53 = arith.constant 0 : index
    %c1_54 = arith.constant 1 : index
    %c1_55 = arith.constant 1 : index
    %c1_56 = arith.constant 1 : index
    %c0_57 = arith.constant 0 : index
    %58 = vector.load %arg3[%c0_53, %c1_54, %c1_55, %c1_56, %c0_57] : memref<1x2x2x11x176xf32, #tpu.memory_space<vmem>>, vector<1x1x1x8x176xf32>
    %59 = vector.shape_cast %58 : vector<1x1x1x8x176xf32> to vector<8x176xf32>
    %c3_58 = arith.constant 3 : index
    %60 = memref.load %arg1[%c3_58] : memref<7xf32, #tpu.memory_space<smem>>
    %61 = vector.broadcast %60 : f32 to vector<8x176xf32>
    %62 = arith.mulf %59, %61 : vector<8x176xf32>
    %63 = arith.addf %57, %62 : vector<8x176xf32>
    %c0_59 = arith.constant 0 : index
    %c0_60 = arith.constant 0 : index
    %c1_61 = arith.constant 1 : index
    %c2_62 = arith.constant 2 : index
    %c0_63 = arith.constant 0 : index
    %64 = vector.load %arg3[%c0_59, %c0_60, %c1_61, %c2_62, %c0_63] : memref<1x2x2x11x176xf32, #tpu.memory_space<vmem>>, vector<1x1x1x8x176xf32>
    %65 = vector.shape_cast %64 : vector<1x1x1x8x176xf32> to vector<8x176xf32>
    %c4_64 = arith.constant 4 : index
    %66 = memref.load %arg1[%c4_64] : memref<7xf32, #tpu.memory_space<smem>>
    %67 = vector.broadcast %66 : f32 to vector<8x176xf32>
    %68 = arith.mulf %65, %67 : vector<8x176xf32>
    %69 = arith.addf %63, %68 : vector<8x176xf32>
    %c0_65 = arith.constant 0 : index
    %c1_66 = arith.constant 1 : index
    %c1_67 = arith.constant 1 : index
    %c2_68 = arith.constant 2 : index
    %c0_69 = arith.constant 0 : index
    %70 = vector.load %arg3[%c0_65, %c1_66, %c1_67, %c2_68, %c0_69] : memref<1x2x2x11x176xf32, #tpu.memory_space<vmem>>, vector<1x1x1x8x176xf32>
    %71 = vector.shape_cast %70 : vector<1x1x1x8x176xf32> to vector<8x176xf32>
    %c5_70 = arith.constant 5 : index
    %72 = memref.load %arg1[%c5_70] : memref<7xf32, #tpu.memory_space<smem>>
    %73 = vector.broadcast %72 : f32 to vector<8x176xf32>
    %74 = arith.mulf %71, %73 : vector<8x176xf32>
    %75 = arith.addf %69, %74 : vector<8x176xf32>
    %c0_71 = arith.constant 0 : index
    %c0_72 = arith.constant 0 : index
    %c1_73 = arith.constant 1 : index
    %c3_74 = arith.constant 3 : index
    %c0_75 = arith.constant 0 : index
    %76 = vector.load %arg3[%c0_71, %c0_72, %c1_73, %c3_74, %c0_75] : memref<1x2x2x11x176xf32, #tpu.memory_space<vmem>>, vector<1x1x1x8x176xf32>
    %77 = vector.shape_cast %76 : vector<1x1x1x8x176xf32> to vector<8x176xf32>
    %c6_76 = arith.constant 6 : index
    %78 = memref.load %arg1[%c6_76] : memref<7xf32, #tpu.memory_space<smem>>
    %79 = vector.broadcast %78 : f32 to vector<8x176xf32>
    %80 = arith.mulf %77, %79 : vector<8x176xf32>
    %81 = arith.addf %75, %80 : vector<8x176xf32>
    %82 = vector.extract_strided_slice %40 {offsets = [0, 0], sizes = [8, 128], strides = [1, 1]} : vector<8x176xf32> to vector<8x128xf32>
    %c0_77 = arith.constant 0 : index
    %83 = memref.load %arg2[%c0_77] : memref<7xf32, #tpu.memory_space<smem>>
    %84 = vector.broadcast %83 : f32 to vector<8x128xf32>
    %85 = arith.mulf %82, %84 : vector<8x128xf32>
    %86 = vector.extract_strided_slice %81 {offsets = [0, 0], sizes = [8, 128], strides = [1, 1]} : vector<8x176xf32> to vector<8x128xf32>
    %c1_78 = arith.constant 1 : index
    %87 = memref.load %arg2[%c1_78] : memref<7xf32, #tpu.memory_space<smem>>
    %88 = vector.broadcast %87 : f32 to vector<8x128xf32>
    %89 = arith.mulf %86, %88 : vector<8x128xf32>
    %90 = arith.addf %85, %89 : vector<8x128xf32>
    %91 = vector.extract_strided_slice %40 {offsets = [0, 16], sizes = [8, 128], strides = [1, 1]} : vector<8x176xf32> to vector<8x128xf32>
    %c2_79 = arith.constant 2 : index
    %92 = memref.load %arg2[%c2_79] : memref<7xf32, #tpu.memory_space<smem>>
    %93 = vector.broadcast %92 : f32 to vector<8x128xf32>
    %94 = arith.mulf %91, %93 : vector<8x128xf32>
    %95 = arith.addf %90, %94 : vector<8x128xf32>
    %96 = vector.extract_strided_slice %81 {offsets = [0, 16], sizes = [8, 128], strides = [1, 1]} : vector<8x176xf32> to vector<8x128xf32>
    %c3_80 = arith.constant 3 : index
    %97 = memref.load %arg2[%c3_80] : memref<7xf32, #tpu.memory_space<smem>>
    %98 = vector.broadcast %97 : f32 to vector<8x128xf32>
    %99 = arith.mulf %96, %98 : vector<8x128xf32>
    %100 = arith.addf %95, %99 : vector<8x128xf32>
    %101 = vector.extract_strided_slice %40 {offsets = [0, 32], sizes = [8, 128], strides = [1, 1]} : vector<8x176xf32> to vector<8x128xf32>
    %c4_81 = arith.constant 4 : index
    %102 = memref.load %arg2[%c4_81] : memref<7xf32, #tpu.memory_space<smem>>
    %103 = vector.broadcast %102 : f32 to vector<8x128xf32>
    %104 = arith.mulf %101, %103 : vector<8x128xf32>
    %105 = arith.addf %100, %104 : vector<8x128xf32>
    %106 = vector.extract_strided_slice %81 {offsets = [0, 32], sizes = [8, 128], strides = [1, 1]} : vector<8x176xf32> to vector<8x128xf32>
    %c5_82 = arith.constant 5 : index
    %107 = memref.load %arg2[%c5_82] : memref<7xf32, #tpu.memory_space<smem>>
    %108 = vector.broadcast %107 : f32 to vector<8x128xf32>
    %109 = arith.mulf %106, %108 : vector<8x128xf32>
    %110 = arith.addf %105, %109 : vector<8x128xf32>
    %111 = vector.extract_strided_slice %40 {offsets = [0, 48], sizes = [8, 128], strides = [1, 1]} : vector<8x176xf32> to vector<8x128xf32>
    %c6_83 = arith.constant 6 : index
    %112 = memref.load %arg2[%c6_83] : memref<7xf32, #tpu.memory_space<smem>>
    %113 = vector.broadcast %112 : f32 to vector<8x128xf32>
    %114 = arith.mulf %111, %113 : vector<8x128xf32>
    %115 = arith.addf %110, %114 : vector<8x128xf32>
    %c0_84 = arith.constant 0 : index
    %c0_85 = arith.constant 0 : index
    %c0_86 = arith.constant 0 : index
    %116 = vector.load %arg4[%c0_84, %c0_85, %c0_86] : memref<1x8x128xf32, #tpu.memory_space<vmem>>, vector<1x8x128xf32>
    %117 = vector.shape_cast %116 : vector<1x8x128xf32> to vector<8x128xf32>
    %118 = vector.shape_cast %115 : vector<8x128xf32> to vector<1x8x128xf32>
    tpu.vector_store %arg4[%c0_84, %c0_85, %c0_86], %118 {strides = array<i32>} : memref<1x8x128xf32, #tpu.memory_space<vmem>>, vector<1x8x128xf32>,
    return
  }
  func.func @transform_0(%arg0: i32) -> i32 {
    %c0_i32 = arith.constant 0 : i32
    %c0_i32_0 = arith.constant 0 : i32
    return %c0_i32 : i32
  }
  func.func @transform_1(%arg0: i32) -> i32 {
    %c0_i32 = arith.constant 0 : i32
    %c0_i32_0 = arith.constant 0 : i32
    return %c0_i32 : i32
  }
  func.func @transform_2(%arg0: i32) -> (i32, i32, i32, i32, i32) {
    %c0_i32 = arith.constant 0 : i32
    %c0_i32_0 = arith.constant 0 : i32
    %c0_i32_1 = arith.constant 0 : i32
    %c0_i32_2 = arith.constant 0 : i32
    %c0_i32_3 = arith.constant 0 : i32
    return %arg0, %c0_i32, %c0_i32_0, %c0_i32_1, %c0_i32_2 : i32, i32, i32, i32, i32
  }
  func.func @transform_3(%arg0: i32) -> (i32, i32, i32) {
    %c0_i32 = arith.constant 0 : i32
    %c0_i32_0 = arith.constant 0 : i32
    %c0_i32_1 = arith.constant 0 : i32
    return %arg0, %c0_i32, %c0_i32_0 : i32, i32, i32
  }
}

</mosaic_0001>

<llo_original>
// kernel: tpu_custom_call.1
$region0: #{tpu_custom_call.1}
  #allocation0 [shape = 'u32[]', space=smem, size = 0x4, offset = 0x4, fixed_abs, tag = 'smem constant byte address 0x4 - core index']
  #allocation1 [shape = 'u32[72,128]{1,0:T(1,128)}', space=vmem, size = 0x9000, scoped, tag = 'internal scratch']
  %s0 = inlined_call_operand.vmem [shape: f32[7], index: 0, kind: input, shape index: {}]
  %s1 = inlined_call_operand.vmem [shape: f32[7], index: 1, kind: input, shape index: {}]
  %s2 = inlined_call_operand.vmem [shape: f32[1,2,2,11,176], index: 2, kind: input, shape index: {}]
  %s3 = inlined_call_operand.hbm [shape: f32[1,8,128], index: 3, kind: output, shape index: {}]
  %s4 = sld [smem:[#allocation0]]
  $region30: #{tpu_custom_call.1} parent=0
    _
  %s6 = ssub.s32 1, %s4
  %s7 = scalar_select 0, %s6, %s4
  $region1: #{tpu_custom_call.1} parent=0
    #allocation2 [shape = 'u8[512]{0}', space=smem, size = 0x200, scoped, tag = 'input window, operand 0, single buffered']
    #allocation3 [shape = 's32[1]{0}', space=sflag, size = 0x4, scoped, tag = 'scoped memory for tpu_custom_call.1']
    #allocation4 [shape = 's32[1]{0}', space=sflag, size = 0x4, scoped, tag = 'scoped memory for tpu_custom_call.1']
    #allocation5 [shape = 'u8[512]{0}', space=smem, size = 0x200, scoped, tag = 'input window, operand 1, single buffered']
    #allocation6 [shape = 's32[1]{0}', space=sflag, size = 0x4, scoped, tag = 'scoped memory for tpu_custom_call.1']
    #allocation7 [shape = 'u8[4096]{0}', space=vmem, size = 0x1000, scoped, tag = 'output window, operand 0, single buffered']
    %8 = vsyncpa [#allocation4], 0
    %9 = vsyncpa [#allocation6], 0
    %10 = vsyncpa [#allocation3], 0
    // Predicated region
    $region2: #{tpu_custom_call.1} parent=1 // pred_check
      _
    $region3: #{tpu_custom_call.1} parent=1 // pred_check_branch
      %12 = sbr.rel (0) target = $region5
    $region4: #{tpu_custom_call.1} parent=1 // pred_region
      %14 = vsyncadd [#allocation4], 0
      %s16 = sshll.u32 %s0, 4
      %s17 = int_to_ptr.vmem [resolvable:$true] %s16
      %19 = dma.vmem_to_smem %s17, 16, [#allocation2], [#allocation4]
    $region5: #{tpu_custom_call.1} parent=1 // pred_fallthru
      _
    // Predicated region
    $region6: #{tpu_custom_call.1} parent=1 // pred_check
      _
    $region7: #{tpu_custom_call.1} parent=1 // pred_check_branch
      %21 = sbr.rel (0) target = $region9
    $region8: #{tpu_custom_call.1} parent=1 // pred_region
      %23 = vsyncadd [#allocation6], 0
      %s25 = sshll.u32 %s1, 4
      %s26 = int_to_ptr.vmem [resolvable:$true] %s25
      %28 = dma.vmem_to_smem %s26, 16, [#allocation5], [#allocation6]
    $region9: #{tpu_custom_call.1} parent=1 // pred_fallthru
      _
    // Predicated region
    $region10: #{tpu_custom_call.1} parent=1 // pred_check
      _
    $region11: #{tpu_custom_call.1} parent=1 // pred_check_branch
      %30 = sbr.rel (0) target = $region13
    $region12: #{tpu_custom_call.1} parent=1 // pred_region
      _
    $region13: #{tpu_custom_call.1} parent=1 // pred_fallthru
      _
    // Predicated region
    $region14: #{tpu_custom_call.1} parent=1 // pred_check
      _
    $region15: #{tpu_custom_call.1} parent=1 // pred_check_branch
      %32 = sbr.rel (0) target = $region17
    $region16: #{tpu_custom_call.1} parent=1 // pred_region
      %34 = dma.done [#allocation4], 16
    $region17: #{tpu_custom_call.1} parent=1 // pred_fallthru
      _
    // Predicated region
    $region18: #{tpu_custom_call.1} parent=1 // pred_check
      _
    $region19: #{tpu_custom_call.1} parent=1 // pred_check_branch
      %36 = sbr.rel (0) target = $region21
    $region20: #{tpu_custom_call.1} parent=1 // pred_region
      %38 = dma.done [#allocation6], 16
    $region21: #{tpu_custom_call.1} parent=1 // pred_fallthru
      _
    %39 = sfence
    %v40 = vld [vmem:[%s2] sm:$0xff]
    %v41 = vld [vmem:[%s2 + $0x8] sm:$0xff]
    %s42 = sld [smem:[#allocation2]]
    %v43 = vstv %s42
    %v44 = vmul.f32 %v40, %v43
    %v45 = vmul.f32 %v41, %v43
    %s46 = scalar_lea.vmem %s2, 64
    %v47 = vld [vmem:[%s46] sm:$0xff]
    %v48 = vld [vmem:[%s46 + $0x8] sm:$0xff]
    %s49 = sld [smem:[#allocation2 + $0x1]]
    %v50 = vstv %s49
    %v51 = vmul.f32 %v47, %v50
    %v52 = vmul.f32 %v48, %v50
    %v53 = vadd.f32 %v44, %v51
    %v54 = vadd.f32 %v45, %v52
    %v55 = vld [vmem:[%s2] sm:$0xfe]
    %v56 = vld [vmem:[%s2 + $0x8] sm:$0xfe]
    %v57 = vld [vmem:[%s2 + $0x10] sm:$0x1]
    %v58 = vld [vmem:[%s2 + $0x18] sm:$0x1]
    %s59 = sld [smem:[#allocation2 + $0x2]]
    %v60 = vstv %s59
    %v61 = vmul.f32 %v55, %v60
    %v62 = vmul.f32 %v56, %v60
    %v63 = vmul.f32 %v57, %v60
    %v64 = vmul.f32 %v58, %v60
    %vm69 = vcmask 1046528
    %v70 = vrot.slane %v61, 1
    %v71 = vrot.slane %v63, 1
    %v72 = vsel %vm69, %v70, %v71
    %v73 = vrot.slane %v62, 1
    %v74 = vrot.slane %v64, 1
    %v75 = vsel %vm69, %v73, %v74
    %v78 = vadd.f32 %v53, %v72
    %v79 = vadd.f32 %v54, %v75
    %v80 = vld [vmem:[%s46] sm:$0xfe]
    %v81 = vld [vmem:[%s46 + $0x8] sm:$0xfe]
    %v82 = vld [vmem:[%s46 + $0x10] sm:$0x1]
    %v83 = vld [vmem:[%s46 + $0x18] sm:$0x1]
    %s84 = sld [smem:[#allocation2 + $0x3]]
    %v85 = vstv %s84
    %v86 = vmul.f32 %v80, %v85
    %v87 = vmul.f32 %v81, %v85
    %v88 = vmul.f32 %v82, %v85
    %v89 = vmul.f32 %v83, %v85
    %v94 = vrot.slane %v86, 1
    %v95 = vrot.slane %v88, 1
    %v96 = vsel %vm69, %v94, %v95
    %v97 = vrot.slane %v87, 1
    %v98 = vrot.slane %v89, 1
    %v99 = vsel %vm69, %v97, %v98
    %v102 = vadd.f32 %v78, %v96
    %v103 = vadd.f32 %v79, %v99
    %v104 = vld [vmem:[%s2] sm:$0xfc]
    %v105 = vld [vmem:[%s2 + $0x8] sm:$0xfc]
    %v106 = vld [vmem:[%s2 + $0x10] sm:$0x3]
    %v107 = vld [vmem:[%s2 + $0x18] sm:$0x3]
    %s108 = sld [smem:[#allocation2 + $0x4]]
    %v109 = vstv %s108
    %v110 = vmul.f32 %v104, %v109
    %v111 = vmul.f32 %v105, %v109
    %v112 = vmul.f32 %v106, %v109
    %v113 = vmul.f32 %v107, %v109
    %vm118 = vcmask 1045504
    %v119 = vrot.slane %v110, 2
    %v120 = vrot.slane %v112, 2
    %v121 = vsel %vm118, %v119, %v120
    %v122 = vrot.slane %v111, 2
    %v123 = vrot.slane %v113, 2
    %v124 = vsel %vm118, %v122, %v123
    %v127 = vadd.f32 %v102, %v121
    %v128 = vadd.f32 %v103, %v124
    %v129 = vld [vmem:[%s46] sm:$0xfc]
    %v130 = vld [vmem:[%s46 + $0x8] sm:$0xfc]
    %v131 = vld [vmem:[%s46 + $0x10] sm:$0x3]
    %v132 = vld [vmem:[%s46 + $0x18] sm:$0x3]
    %s133 = sld [smem:[#allocation2 + $0x5]]
    %v134 = vstv %s133
    %v135 = vmul.f32 %v129, %v134
    %v136 = vmul.f32 %v130, %v134
    %v137 = vmul.f32 %v131, %v134
    %v138 = vmul.f32 %v132, %v134
    %v143 = vrot.slane %v135, 2
    %v144 = vrot.slane %v137, 2
    %v145 = vsel %vm118, %v143, %v144
    %v146 = vrot.slane %v136, 2
    %v147 = vrot.slane %v138, 2
    %v148 = vsel %vm118, %v146, %v147
    %v151 = vadd.f32 %v127, %v145
    %v152 = vadd.f32 %v128, %v148
    %v153 = vld [vmem:[%s2] sm:$0xf8]
    %v154 = vld [vmem:[%s2 + $0x8] sm:$0xf8]
    %v155 = vld [vmem:[%s2 + $0x10] sm:$0x7]
    %v156 = vld [vmem:[%s2 + $0x18] sm:$0x7]
    %s157 = sld [smem:[#allocation2 + $0x6]]
    %v158 = vstv %s157
    %v159 = vmul.f32 %v153, %v158
    %v160 = vmul.f32 %v154, %v158
    %v161 = vmul.f32 %v155, %v158
    %v162 = vmul.f32 %v156, %v158
    %vm167 = vcmask 1044480
    %v168 = vrot.slane %v159, 3
    %v169 = vrot.slane %v161, 3
    %v170 = vsel %vm167, %v168, %v169
    %v171 = vrot.slane %v160, 3
    %v172 = vrot.slane %v162, 3
    %v173 = vsel %vm167, %v171, %v172
    %v176 = vadd.f32 %v151, %v170
    %v177 = vadd.f32 %v152, %v173
    %s178 = scalar_lea.vmem %s2, 32
    %v179 = vld [vmem:[%s178] sm:$0xff]
    %v180 = vld [vmem:[%s178 + $0x8] sm:$0xff]
    %v181 = vmul.f32 %v179, %v43
    %v182 = vmul.f32 %v180, %v43
    %s183 = scalar_lea.vmem %s2, 96
    %v184 = vld [vmem:[%s183] sm:$0xff]
    %v185 = vld [vmem:[%s183 + $0x8] sm:$0xff]
    %v186 = vmul.f32 %v184, %v50
    %v187 = vmul.f32 %v185, %v50
    %v188 = vadd.f32 %v181, %v186
    %v189 = vadd.f32 %v182, %v187
    %v190 = vld [vmem:[%s178] sm:$0xfe]
    %v191 = vld [vmem:[%s178 + $0x8] sm:$0xfe]
    %v192 = vld [vmem:[%s178 + $0x10] sm:$0x1]
    %v193 = vld [vmem:[%s178 + $0x18] sm:$0x1]
    %v194 = vmul.f32 %v190, %v60
    %v195 = vmul.f32 %v191, %v60
    %v196 = vmul.f32 %v192, %v60
    %v197 = vmul.f32 %v193, %v60
    %v202 = vrot.slane %v194, 1
    %v203 = vrot.slane %v196, 1
    %v204 = vsel %vm69, %v202, %v203
    %v205 = vrot.slane %v195, 1
    %v206 = vrot.slane %v197, 1
    %v207 = vsel %vm69, %v205, %v206
    %v210 = vadd.f32 %v188, %v204
    %v211 = vadd.f32 %v189, %v207
    %v212 = vld [vmem:[%s183] sm:$0xfe]
    %v213 = vld [vmem:[%s183 + $0x8] sm:$0xfe]
    %v214 = vld [vmem:[%s183 + $0x10] sm:$0x1]
    %v215 = vld [vmem:[%s183 + $0x18] sm:$0x1]
    %v216 = vmul.f32 %v212, %v85
    %v217 = vmul.f32 %v213, %v85
    %v218 = vmul.f32 %v214, %v85
    %v219 = vmul.f32 %v215, %v85
    %v224 = vrot.slane %v216, 1
    %v225 = vrot.slane %v218, 1
    %v226 = vsel %vm69, %v224, %v225
    %v227 = vrot.slane %v217, 1
    %v228 = vrot.slane %v219, 1
    %v229 = vsel %vm69, %v227, %v228
    %v232 = vadd.f32 %v210, %v226
    %v233 = vadd.f32 %v211, %v229
    %v234 = vld [vmem:[%s178] sm:$0xfc]
    %v235 = vld [vmem:[%s178 + $0x8] sm:$0xfc]
    %v236 = vld [vmem:[%s178 + $0x10] sm:$0x3]
    %v237 = vld [vmem:[%s178 + $0x18] sm:$0x3]
    %v238 = vmul.f32 %v234, %v109
    %v239 = vmul.f32 %v235, %v109
    %v240 = vmul.f32 %v236, %v109
    %v241 = vmul.f32 %v237, %v109
    %v246 = vrot.slane %v238, 2
    %v247 = vrot.slane %v240, 2
    %v248 = vsel %vm118, %v246, %v247
    %v249 = vrot.slane %v239, 2
    %v250 = vrot.slane %v241, 2
    %v251 = vsel %vm118, %v249, %v250
    %v254 = vadd.f32 %v232, %v248
    %v255 = vadd.f32 %v233, %v251
    %v256 = vld [vmem:[%s183] sm:$0xfc]
    %v257 = vld [vmem:[%s183 + $0x8] sm:$0xfc]
    %v258 = vld [vmem:[%s183 + $0x10] sm:$0x3]
    %v259 = vld [vmem:[%s183 + $0x18] sm:$0x3]
    %v260 = vmul.f32 %v256, %v134
    %v261 = vmul.f32 %v257, %v134
    %v262 = vmul.f32 %v258, %v134
    %v263 = vmul.f32 %v259, %v134
    %v268 = vrot.slane %v260, 2
    %v269 = vrot.slane %v262, 2
    %v270 = vsel %vm118, %v268, %v269
    %v271 = vrot.slane %v261, 2
    %v272 = vrot.slane %v263, 2
    %v273 = vsel %vm118, %v271, %v272
    %v276 = vadd.f32 %v254, %v270
    %v277 = vadd.f32 %v255, %v273
    %v278 = vld [vmem:[%s178] sm:$0xf8]
    %v279 = vld [vmem:[%s178 + $0x8] sm:$0xf8]
    %v280 = vld [vmem:[%s178 + $0x10] sm:$0x7]
    %v281 = vld [vmem:[%s178 + $0x18] sm:$0x7]
    %v282 = vmul.f32 %v278, %v158
    %v283 = vmul.f32 %v279, %v158
    %v284 = vmul.f32 %v280, %v158
    %v285 = vmul.f32 %v281, %v158
    %v290 = vrot.slane %v282, 3
    %v291 = vrot.slane %v284, 3
    %v292 = vsel %vm167, %v290, %v291
    %v293 = vrot.slane %v283, 3
    %v294 = vrot.slane %v285, 3
    %v295 = vsel %vm167, %v293, %v294
    %v298 = vadd.f32 %v276, %v292
    %v299 = vadd.f32 %v277, %v295
    %s300 = sld [smem:[#allocation5]]
    %v301 = vstv %s300
    %v302 = vmul.f32 %v176, %v301
    %s303 = sld [smem:[#allocation5 + $0x1]]
    %v304 = vstv %s303
    %v305 = vmul.f32 %v298, %v304
    %v306 = vadd.f32 %v302, %v305
    %s307 = sld [smem:[#allocation5 + $0x2]]
    %v308 = vstv %s307
    %v309 = vmul.f32 %v176, %v308
    %v310 = vmul.f32 %v177, %v308
    %313 = vrot.lane.b32.xlu0 %v309, 112
    %v314 = vpop.permute.xlu0 %313
    %315 = vrot.lane.b32.xlu0 %v310, 112
    %v316 = vpop.permute.xlu0 %315
    %vm317 = vcmask 916480
    %v318 = vsel %vm317, %v314, %v316
    %v320 = vadd.f32 %v306, %v318
    %s321 = sld [smem:[#allocation5 + $0x3]]
    %v322 = vstv %s321
    %v323 = vmul.f32 %v298, %v322
    %v324 = vmul.f32 %v299, %v322
    %327 = vrot.lane.b32.xlu0 %v323, 112
    %v328 = vpop.permute.xlu0 %327
    %329 = vrot.lane.b32.xlu0 %v324, 112
    %v330 = vpop.permute.xlu0 %329
    %v331 = vsel %vm317, %v328, %v330
    %v333 = vadd.f32 %v320, %v331
    %s334 = sld [smem:[#allocation5 + $0x4]]
    %v335 = vstv %s334
    %v336 = vmul.f32 %v176, %v335
    %v337 = vmul.f32 %v177, %v335
    %340 = vrot.lane.b32.xlu0 %v336, 96
    %v341 = vpop.permute.xlu0 %340
    %342 = vrot.lane.b32.xlu0 %v337, 96
    %v343 = vpop.permute.xlu0 %342
    %vm344 = vcmask 785408
    %v345 = vsel %vm344, %v341, %v343
    %v347 = vadd.f32 %v333, %v345
    %s348 = sld [smem:[#allocation5 + $0x5]]
    %v349 = vstv %s348
    %v350 = vmul.f32 %v298, %v349
    %v351 = vmul.f32 %v299, %v349
    %354 = vrot.lane.b32.xlu0 %v350, 96
    %v355 = vpop.permute.xlu0 %354
    %356 = vrot.lane.b32.xlu0 %v351, 96
    %v357 = vpop.permute.xlu0 %356
    %v358 = vsel %vm344, %v355, %v357
    %v360 = vadd.f32 %v347, %v358
    %s361 = sld [smem:[#allocation5 + $0x6]]
    %v362 = vstv %s361
    %v363 = vmul.f32 %v176, %v362
    %v364 = vmul.f32 %v177, %v362
    %367 = vrot.lane.b32.xlu0 %v363, 80
    %v368 = vpop.permute.xlu0 %367
    %369 = vrot.lane.b32.xlu0 %v364, 80
    %v370 = vpop.permute.xlu0 %369
    %vm371 = vcmask 654336
    %v372 = vsel %vm371, %v368, %v370
    %v374 = vadd.f32 %v360, %v372
    %375 = vst [vmem:[#allocation7] sm:$0xff] %v374
    // Predicated region
    $region22: #{tpu_custom_call.1} parent=1 // pred_check
      _
    $region23: #{tpu_custom_call.1} parent=1 // pred_check_branch
      %377 = sbr.rel (0) target = $region25
    $region24: #{tpu_custom_call.1} parent=1 // pred_region
      %379 = vsyncadd [#allocation3], 0
      %s381 = sshll.u32 [#allocation7], 4
      %s382 = int_to_ptr.vmem [resolvable:$true] %s381
      %s383 = sshll.u32 %s3, 4
      %s384 = int_to_ptr.hbm [resolvable:$true] %s383
      %386 = dma.vmem_to_hbm [thread:$0]  %s382, 128, %s384, [#allocation3]
    $region25: #{tpu_custom_call.1} parent=1 // pred_fallthru
      _
    // Predicated region
    $region26: #{tpu_custom_call.1} parent=1 // pred_check
      _
    $region27: #{tpu_custom_call.1} parent=1 // pred_check_branch
      %388 = sbr.rel (0) target = $region29
    $region28: #{tpu_custom_call.1} parent=1 // pred_region
      %390 = dma.done [#allocation3], 128
    $region29: #{tpu_custom_call.1} parent=1 // pred_fallthru
      _
    %391 = vsyncpa [#allocation3], 1
    %392 = vsyncpa [#allocation4], 1
    %393 = vsyncpa [#allocation6], 1

</llo_original>
